<compile_context>
chip_gen: v5e
topology: v5e:2x2
jax: 0.10.0
libtpu: 0.0.40
codegen_flags: <defaults>
</compile_context>

<pallas_src>
import math

import jax
import jax.numpy as jnp
from jax.experimental import pallas as pl
from jax.experimental.pallas import tpu as pltpu

LANE = 128
SUBLANE = 8
# Only split a single-tile batch across two cores when each half has real work.
_MIN_SPLIT_ROWS = 256


def _round_up(x, m):
    return (x + m - 1) // m * m


def actor_forward_kernel(x_ref, w1_ref, b1_ref, w2_ref, b2_ref, w3_ref, b3_ref,
                         out_ref):
    # fc1 + ReLU (MXU dot, f32 accumulation; bias/ReLU on the VPU in f32).
    x = x_ref[...]
    h1 = jnp.dot(x.astype(w1_ref.dtype), w1_ref[...],
                 preferred_element_type=jnp.float32)
    h1 = jnp.maximum(h1 + b1_ref[...], 0.0)
    # fc2 + ReLU. Only the dot operand is cast to the weight dtype (bf16 path).
    h2 = jnp.dot(h1.astype(w2_ref.dtype), w2_ref[...],
                 preferred_element_type=jnp.float32)
    h2 = jnp.maximum(h2 + b2_ref[...], 0.0)
    # mu + tanh (tanh on the EUP, f32), then cast to the output dtype.
    mu = jnp.dot(h2.astype(w3_ref.dtype), w3_ref[...],
                 preferred_element_type=jnp.float32)
    out_ref[...] = jnp.tanh(mu + b3_ref[...]).astype(out_ref.dtype)


def pack_params(params, compute_dtype=jnp.bfloat16):
    """Zero-pad feature dims to 128 lanes; cast weights to the MXU operand dtype.

    bf16 operands (default) run the MXU at full rate on all generations and
    halve the state DMA; accumulation stays f32 inside the kernel.
    """
    w1, b1 = params["w1"], params["b1"]
    w2, b2 = params["w2"], params["b2"]
    w3, b3 = params["w3"], params["b3"]
    in_dims = w1.shape[0]
    fc1_p = _round_up(w1.shape[1], LANE)
    fc2_p = _round_up(w2.shape[1], LANE)
    na_p = _round_up(w3.shape[1], LANE)

    def pad2(a, rows, cols):
        return jnp.pad(a, ((0, rows - a.shape[0]), (0, cols - a.shape[1])))

    return {
        "w1": pad2(w1, in_dims, fc1_p).astype(compute_dtype),
        "b1": pad2(b1.reshape(1, -1), 1, fc1_p).astype(jnp.float32),
        "w2": pad2(w2, fc1_p, fc2_p).astype(compute_dtype),
        "b2": pad2(b2.reshape(1, -1), 1, fc2_p).astype(jnp.float32),
        "w3": pad2(w3, fc2_p, na_p).astype(compute_dtype),
        "b3": pad2(b3.reshape(1, -1), 1, na_p).astype(jnp.float32),
    }


def _choose_batch_tiling(B, tile_batch):
    """Pick (tile_rows, num_tiles): tile multiple of 8 sublanes, minimal batch
    padding, and an EVEN tile count whenever the batch is split (v7x megacore
    balance)."""
    n = max(1, math.ceil(B / max(tile_batch, SUBLANE)))
    if n == 1:
        if B >= _MIN_SPLIT_ROWS:
            n = 2              # split large single-tile batches across 2 cores
    elif n % 2:
        n += 1                 # even tile count -> balanced "parallel" split
    tb = _round_up(math.ceil(B / n), SUBLANE)
    return tb, n


def actor_forward(state, packed, n_actions, *, tile_batch=2048,
                  out_dtype=jnp.float32):
    """state: (B, input_dims) f32. packed: output of pack_params()."""
    w1, b1 = packed["w1"], packed["b1"]
    w2, b2 = packed["w2"], packed["b2"]
    w3, b3 = packed["w3"], packed["b3"]

    B, in_dims = state.shape
    fc1_p, fc2_p, na_p = w1.shape[1], w2.shape[1], w3.shape[1]

    tb, num_tiles = _choose_batch_tiling(B, tile_batch)
    b_pad = tb * num_tiles

    # Cast the state to the MXU operand dtype in the wrapper (halves x DMA on
    # the bf16 path) and pad the batch to the (small) tile multiple.
    x = state.astype(w1.dtype)
    if b_pad != B:
        x = jnp.pad(x, ((0, b_pad - B), (0, 0)))

    # State tile streams with the default double-buffered pipeline; weights and
    # biases use constant index maps so they are DMA'd once and stay resident.
    state_spec = pl.BlockSpec((tb, in_dims), lambda i: (i, 0))
    const = lambda arr: pl.BlockSpec(arr.shape, lambda i: (0, 0))

    out_itemsize = jnp.dtype(out_dtype).itemsize
    weight_bytes = sum(a.size * a.dtype.itemsize
                       for a in (w1, b1, w2, b2, w3, b3))
    x_tile_bytes = tb * in_dims * x.dtype.itemsize
    out_tile_bytes = tb * na_p * out_itemsize
    hidden_bytes = tb * (fc1_p + fc2_p + na_p) * 4  # f32 intermediates

    # Explicit scoped-VMEM limit only when a very large tile would outgrow the
    # v5e 16 MiB default (v6e/v7x defaults are 32 MiB); otherwise leave it be.
    vmem_need = weight_bytes + 2 * x_tile_bytes + 2 * out_tile_bytes + hidden_bytes
    vmem_limit = None
    if vmem_need > (12 << 20):
        vmem_limit = int(min(2 * vmem_need, 64 << 20))

    flops = 2 * b_pad * (in_dims * fc1_p + fc1_p * fc2_p + fc2_p * na_p)
    bytes_accessed = (x.size * x.dtype.itemsize + weight_bytes
                      + b_pad * na_p * out_itemsize)
    cost = pl.CostEstimate(flops=flops, transcendentals=b_pad * na_p,
                           bytes_accessed=bytes_accessed)

    out = pl.pallas_call(
        actor_forward_kernel,
        out_shape=jax.ShapeDtypeStruct((b_pad, na_p), out_dtype),
        grid=(num_tiles,),
        in_specs=[
            state_spec,
            const(w1), const(b1),
            const(w2), const(b2),
            const(w3), const(b3),
        ],
        out_specs=pl.BlockSpec((tb, na_p), lambda i: (i, 0)),
        compiler_params=pltpu.CompilerParams(
            dimension_semantics=("parallel",),
            vmem_limit_bytes=vmem_limit),
        cost_estimate=cost,
    )(x, w1, b1, w2, b2, w3, b3)

    # Strip batch padding and padded output lanes.
    return out[:B, :n_actions]


def init_linear(key, fan_in, fan_out):
    """PyTorch nn.Linear default init: U(-1/sqrt(fan_in), 1/sqrt(fan_in))."""
    kw, kb = jax.random.split(key)
    bound = 1.0 / jnp.sqrt(jnp.float32(fan_in))
    w = jax.random.uniform(kw, (fan_in, fan_out), jnp.float32, -bound, bound)
    b = jax.random.uniform(kb, (1, fan_out), jnp.float32, -bound, bound)
    return w, b


def reference_forward(state, params):
    h1 = jnp.maximum(state @ params["w1"] + params["b1"], 0.0)
    h2 = jnp.maximum(h1 @ params["w2"] + params["b2"], 0.0)
    return jnp.tanh(h2 @ params["w3"] + params["b3"])


# TODO(synk): the Adam optimizer and checkpoint save/load of the PyTorch module
# are training/IO machinery, not part of the forward pass, and are not ported.

if __name__ == "__main__":
    # Small shapes consistent with the module's __init__ signature.
    input_dims = 8     # *input_dims for nn.Linear
    fc1_dims = 32
    fc2_dims = 32
    n_actions = 4

    key = jax.random.PRNGKey(0)
    k_s1, k_s2, k_s3, k1, k2, k3 = jax.random.split(key, 6)

    w1, b1 = init_linear(k1, input_dims, fc1_dims)
    w2, b2 = init_linear(k2, fc1_dims, fc2_dims)
    w3, b3 = init_linear(k3, fc2_dims, n_actions)
    params = {"w1": w1, "b1": b1, "w2": w2, "b2": b2, "w3": w3, "b3": b3}

    # --- small batch, f32 everywhere (tight tolerance vs. the reference) ---
    state = jax.random.normal(k_s1, (2, input_dims), jnp.float32)
    packed_f32 = pack_params(params, compute_dtype=jnp.float32)
    mu = jax.block_until_ready(
        actor_forward(state, packed_f32, n_actions, out_dtype=jnp.float32))
    ref = jax.block_until_ready(reference_forward(state, params))
    assert mu.shape == (2, n_actions)
    assert jnp.allclose(mu, ref, atol=1e-5, rtol=1e-5)

    # --- mid batch (600): bf16 operands (default pack), bf16 output, split
    #     into an even 2-tile grid (304 rows/tile, only 8 padded rows) ---
    big_state = jax.random.normal(k_s2, (600, input_dims), jnp.float32)
    packed_bf16 = pack_params(params)          # bf16 MXU operands by default
    mu_big = jax.block_until_ready(
        actor_forward(big_state, packed_bf16, n_actions, out_dtype=jnp.bfloat16))
    ref_big = jax.block_until_ready(reference_forward(big_state, params))
    assert mu_big.shape == (600, n_actions)
    assert jnp.allclose(mu_big.astype(jnp.float32), ref_big, atol=2e-2, rtol=2e-2)

    # --- larger batch (4500) with tile_batch=2048: ceil(4500/2048)=3 tiles is
    #     rounded to an even 4-tile grid (1128 rows/tile, 12 padded rows) ---
    huge_state = jax.random.normal(k_s3, (4500, input_dims), jnp.float32)
    mu_huge = jax.block_until_ready(
        actor_forward(huge_state, packed_bf16, n_actions,
                      tile_batch=2048, out_dtype=jnp.bfloat16))
    ref_huge = jax.block_until_ready(reference_forward(huge_state, params))
    assert mu_huge.shape == (4500, n_actions)
    assert jnp.allclose(mu_huge.astype(jnp.float32), ref_huge,
                        atol=2e-2, rtol=2e-2)

    print("KERNEL_OK")
</pallas_src>

<mosaic_0001>
module attributes {stable_mosaic.version = 11 : i64} {
  func.func @actor_forward_kernel(%arg0: i32, %arg1: memref<8x8xf32, #tpu.memory_space<vmem>>, %arg2: memref<8x128xf32, #tpu.memory_space<vmem>>, %arg3: memref<1x128xf32, #tpu.memory_space<vmem>>, %arg4: memref<128x128xf32, #tpu.memory_space<vmem>>, %arg5: memref<1x128xf32, #tpu.memory_space<vmem>>, %arg6: memref<128x128xf32, #tpu.memory_space<vmem>>, %arg7: memref<1x128xf32, #tpu.memory_space<vmem>>, %arg8: memref<8x128xf32, #tpu.memory_space<vmem>>) attributes {dimension_semantics = [#tpu.dimension_semantics<parallel>], iteration_bounds = array<i64: 1>, scalar_prefetch = 0 : i64, scratch_operands = 0 : i64, tpu.core_type = #tpu.core_type<tc>, window_params = [{transform_indices = @transform_0, window_bounds = array<i64: 8, 8>}, {pipeline_mode = #tpu.pipeline_mode<synchronous>, transform_indices = @transform_1, window_bounds = array<i64: 8, 128>}, {pipeline_mode = #tpu.pipeline_mode<synchronous>, transform_indices = @transform_2, window_bounds = array<i64: 1, 128>}, {pipeline_mode = #tpu.pipeline_mode<synchronous>, transform_indices = @transform_3, window_bounds = array<i64: 128, 128>}, {pipeline_mode = #tpu.pipeline_mode<synchronous>, transform_indices = @transform_4, window_bounds = array<i64: 1, 128>}, {pipeline_mode = #tpu.pipeline_mode<synchronous>, transform_indices = @transform_5, window_bounds = array<i64: 128, 128>}, {pipeline_mode = #tpu.pipeline_mode<synchronous>, transform_indices = @transform_6, window_bounds = array<i64: 1, 128>}, {transform_indices = @transform_7, window_bounds = array<i64: 8, 128>}]} {
    %c0 = arith.constant 0 : index
    %c0_0 = arith.constant 0 : index
    %0 = vector.load %arg1[%c0, %c0_0] : memref<8x8xf32, #tpu.memory_space<vmem>>, vector<8x8xf32>
    %c0_1 = arith.constant 0 : index
    %c0_2 = arith.constant 0 : index
    %1 = vector.load %arg2[%c0_1, %c0_2] : memref<8x128xf32, #tpu.memory_space<vmem>>, vector<8x128xf32>
    %cst = arith.constant dense<0.000000e+00> : vector<8x128xf32>
    %2 = tpu.matmul %0, %1, %cst {dimension_numbers = #tpu.dot_dimension_numbers<[1], [0], [0], [1], [0, 0, 1, 1], [], []>} : vector<8x8xf32>, vector<8x128xf32>, vector<8x128xf32> -> vector<8x128xf32>
    %c0_3 = arith.constant 0 : index
    %c0_4 = arith.constant 0 : index
    %3 = vector.load %arg3[%c0_3, %c0_4] : memref<1x128xf32, #tpu.memory_space<vmem>>, vector<1x128xf32>
    %4 = vector.broadcast %3 : vector<1x128xf32> to vector<8x128xf32>
    %5 = arith.addf %2, %4 : vector<8x128xf32>
    %cst_5 = arith.constant 0.000000e+00 : f32
    %6 = vector.broadcast %cst_5 : f32 to vector<8x128xf32>
    %7 = arith.maximumf %5, %6 : vector<8x128xf32>
    %c0_6 = arith.constant 0 : index
    %c0_7 = arith.constant 0 : index
    %8 = vector.load %arg4[%c0_6, %c0_7] : memref<128x128xf32, #tpu.memory_space<vmem>>, vector<128x128xf32>
    %cst_8 = arith.constant dense<0.000000e+00> : vector<8x128xf32>
    %9 = tpu.matmul %7, %8, %cst_8 {dimension_numbers = #tpu.dot_dimension_numbers<[1], [0], [0], [1], [0, 0, 1, 1], [], []>} : vector<8x128xf32>, vector<128x128xf32>, vector<8x128xf32> -> vector<8x128xf32>
    %c0_9 = arith.constant 0 : index
    %c0_10 = arith.constant 0 : index
    %10 = vector.load %arg5[%c0_9, %c0_10] : memref<1x128xf32, #tpu.memory_space<vmem>>, vector<1x128xf32>
    %11 = vector.broadcast %10 : vector<1x128xf32> to vector<8x128xf32>
    %12 = arith.addf %9, %11 : vector<8x128xf32>
    %cst_11 = arith.constant 0.000000e+00 : f32
    %13 = vector.broadcast %cst_11 : f32 to vector<8x128xf32>
    %14 = arith.maximumf %12, %13 : vector<8x128xf32>
    %c0_12 = arith.constant 0 : index
    %c0_13 = arith.constant 0 : index
    %15 = vector.load %arg6[%c0_12, %c0_13] : memref<128x128xf32, #tpu.memory_space<vmem>>, vector<128x128xf32>
    %cst_14 = arith.constant dense<0.000000e+00> : vector<8x128xf32>
    %16 = tpu.matmul %14, %15, %cst_14 {dimension_numbers = #tpu.dot_dimension_numbers<[1], [0], [0], [1], [0, 0, 1, 1], [], []>} : vector<8x128xf32>, vector<128x128xf32>, vector<8x128xf32> -> vector<8x128xf32>
    %c0_15 = arith.constant 0 : index
    %c0_16 = arith.constant 0 : index
    %17 = vector.load %arg7[%c0_15, %c0_16] : memref<1x128xf32, #tpu.memory_space<vmem>>, vector<1x128xf32>
    %18 = vector.broadcast %17 : vector<1x128xf32> to vector<8x128xf32>
    %19 = arith.addf %16, %18 : vector<8x128xf32>
    %20 = math.tanh %19 : vector<8x128xf32>
    %c0_17 = arith.constant 0 : index
    %c0_18 = arith.constant 0 : index
    %21 = vector.load %arg8[%c0_17, %c0_18] : memref<8x128xf32, #tpu.memory_space<vmem>>, vector<8x128xf32>
    tpu.vector_store %arg8[%c0_17, %c0_18], %20 {strides = array<i32>} : memref<8x128xf32, #tpu.memory_space<vmem>>, vector<8x128xf32>,
    return
  }
  func.func @transform_0(%arg0: i32) -> (i32, i32) {
    %c0_i32 = arith.constant 0 : i32
    %c0_i32_0 = arith.constant 0 : i32
    return %arg0, %c0_i32 : i32, i32
  }
  func.func @transform_1(%arg0: i32) -> (i32, i32) {
    %c0_i32 = arith.constant 0 : i32
    %c0_i32_0 = arith.constant 0 : i32
    %c0_i32_1 = arith.constant 0 : i32
    return %c0_i32, %c0_i32_0 : i32, i32
  }
  func.func @transform_2(%arg0: i32) -> (i32, i32) {
    %c0_i32 = arith.constant 0 : i32
    %c0_i32_0 = arith.constant 0 : i32
    %c0_i32_1 = arith.constant 0 : i32
    return %c0_i32, %c0_i32_0 : i32, i32
  }
  func.func @transform_3(%arg0: i32) -> (i32, i32) {
    %c0_i32 = arith.constant 0 : i32
    %c0_i32_0 = arith.constant 0 : i32
    %c0_i32_1 = arith.constant 0 : i32
    return %c0_i32, %c0_i32_0 : i32, i32
  }
  func.func @transform_4(%arg0: i32) -> (i32, i32) {
    %c0_i32 = arith.constant 0 : i32
    %c0_i32_0 = arith.constant 0 : i32
    %c0_i32_1 = arith.constant 0 : i32
    return %c0_i32, %c0_i32_0 : i32, i32
  }
  func.func @transform_5(%arg0: i32) -> (i32, i32) {
    %c0_i32 = arith.constant 0 : i32
    %c0_i32_0 = arith.constant 0 : i32
    %c0_i32_1 = arith.constant 0 : i32
    return %c0_i32, %c0_i32_0 : i32, i32
  }
  func.func @transform_6(%arg0: i32) -> (i32, i32) {
    %c0_i32 = arith.constant 0 : i32
    %c0_i32_0 = arith.constant 0 : i32
    %c0_i32_1 = arith.constant 0 : i32
    return %c0_i32, %c0_i32_0 : i32, i32
  }
  func.func @transform_7(%arg0: i32) -> (i32, i32) {
    %c0_i32 = arith.constant 0 : i32
    %c0_i32_0 = arith.constant 0 : i32
    return %arg0, %c0_i32 : i32, i32
  }
}

</mosaic_0001>

<llo_original>
// kernel: tpu_custom_call.1
$region0: #{tpu_custom_call.1}
  #allocation0 [shape = 'u32[]', space=smem, size = 0x4, offset = 0x4, fixed_abs, tag = 'smem constant byte address 0x4 - core index']
  #allocation1 [shape = 'u32[72,128]{1,0:T(1,128)}', space=vmem, size = 0x9000, scoped, tag = 'internal scratch']
  %s0 = inlined_call_operand.hbm [shape: f32[8,8], index: 0, kind: input, shape index: {}]
  %s1 = inlined_call_operand.hbm [shape: f32[8,128], index: 1, kind: input, shape index: {}]
  %s2 = inlined_call_operand.vmem [shape: f32[1,128], index: 2, kind: input, shape index: {}]
  %s3 = inlined_call_operand.hbm [shape: f32[128,128], index: 3, kind: input, shape index: {}]
  %s4 = inlined_call_operand.vmem [shape: f32[1,128], index: 4, kind: input, shape index: {}]
  %s5 = inlined_call_operand.hbm [shape: f32[128,128], index: 5, kind: input, shape index: {}]
  %s6 = inlined_call_operand.vmem [shape: f32[1,128], index: 6, kind: input, shape index: {}]
  %s7 = inlined_call_operand.hbm [shape: f32[8,128], index: 7, kind: output, shape index: {}]
  %s8 = sld [smem:[#allocation0]]
  $region54: #{tpu_custom_call.1} parent=0
    _
  %s10 = ssub.s32 1, %s8
  %s11 = scalar_select 0, %s10, %s8
  $region1: #{tpu_custom_call.1} parent=0
    #allocation2 [shape = 'u8[4096]{0}', space=vmem, size = 0x1000, scoped, tag = 'input window, operand 0, single buffered']
    #allocation3 [shape = 's32[1]{0}', space=sflag, size = 0x4, scoped, tag = 'scoped memory for tpu_custom_call.1']
    #allocation4 [shape = 's32[1]{0}', space=sflag, size = 0x4, scoped, tag = 'scoped memory for tpu_custom_call.1']
    #allocation5 [shape = 'u8[4096]{0}', space=vmem, size = 0x1000, scoped, tag = 'input window, operand 1, single buffered']
    #allocation6 [shape = 's32[1]{0}', space=sflag, size = 0x4, scoped, tag = 'scoped memory for tpu_custom_call.1']
    #allocation7 [shape = 'u8[65536]{0}', space=vmem, size = 0x10000, scoped, tag = 'input window, operand 3, single buffered']
    #allocation8 [shape = 'u8[65536]{0}', space=vmem, size = 0x10000, scoped, tag = 'input window, operand 5, single buffered']
    #allocation9 [shape = 's32[1]{0}', space=sflag, size = 0x4, scoped, tag = 'scoped memory for tpu_custom_call.1']
    #allocation10 [shape = 'u8[4096]{0}', space=vmem, size = 0x1000, scoped, tag = 'output window, operand 0, single buffered']
    %12 = vsyncpa [#allocation3], 0
    %13 = vsyncpa [#allocation6], 0
    %14 = vsyncpa [#allocation9], 0
    %15 = vsyncpa [#allocation4], 0
    // Predicated region
    $region2: #{tpu_custom_call.1} parent=1 // pred_check
      _
    $region3: #{tpu_custom_call.1} parent=1 // pred_check_branch
      %17 = sbr.rel (0) target = $region5
    $region4: #{tpu_custom_call.1} parent=1 // pred_region
      %19 = vsyncadd [#allocation3], 0
      %s21 = sshll.u32 %s0, 4
      %s22 = int_to_ptr.hbm [resolvable:$true] %s21
      %s23 = sshll.u32 [#allocation2], 4
      %s24 = int_to_ptr.vmem [resolvable:$true] %s23
      %26 = dma.hbm_to_vmem [thread:$0]  %s22, 128, %s24, [#allocation3]
    $region5: #{tpu_custom_call.1} parent=1 // pred_fallthru
      _
    // Predicated region
    $region6: #{tpu_custom_call.1} parent=1 // pred_check
      _
    $region7: #{tpu_custom_call.1} parent=1 // pred_check_branch
      %28 = sbr.rel (0) target = $region9
    $region8: #{tpu_custom_call.1} parent=1 // pred_region
      %30 = vsyncadd [#allocation6], 0
      %s32 = sshll.u32 %s1, 4
      %s33 = int_to_ptr.hbm [resolvable:$true] %s32
      %s34 = sshll.u32 [#allocation5], 4
      %s35 = int_to_ptr.vmem [resolvable:$true] %s34
      %37 = dma.hbm_to_vmem [thread:$0]  %s33, 128, %s35, [#allocation6]
    $region9: #{tpu_custom_call.1} parent=1 // pred_fallthru
      _
    // Predicated region
    $region10: #{tpu_custom_call.1} parent=1 // pred_check
      _
    $region11: #{tpu_custom_call.1} parent=1 // pred_check_branch
      %39 = sbr.rel (0) target = $region13
    $region12: #{tpu_custom_call.1} parent=1 // pred_region
      _
    $region13: #{tpu_custom_call.1} parent=1 // pred_fallthru
      _
    // Predicated region
    $region14: #{tpu_custom_call.1} parent=1 // pred_check
      _
    $region15: #{tpu_custom_call.1} parent=1 // pred_check_branch
      %41 = sbr.rel (0) target = $region17
    $region16: #{tpu_custom_call.1} parent=1 // pred_region
      %43 = vsyncadd [#allocation6], 0
      %s44 = sshll.u32 %s3, 4
      %s45 = int_to_ptr.hbm [resolvable:$true] %s44
      %s46 = sshll.u32 [#allocation7], 4
      %s47 = int_to_ptr.vmem [resolvable:$true] %s46
      %52 = dma.hbm_to_vmem [thread:$0]  %s45, 2048, %s47, [#allocation6], 128, 128, 8
    $region17: #{tpu_custom_call.1} parent=1 // pred_fallthru
      _
    // Predicated region
    $region18: #{tpu_custom_call.1} parent=1 // pred_check
      _
    $region19: #{tpu_custom_call.1} parent=1 // pred_check_branch
      %54 = sbr.rel (0) target = $region21
    $region20: #{tpu_custom_call.1} parent=1 // pred_region
      _
    $region21: #{tpu_custom_call.1} parent=1 // pred_fallthru
      _
    // Predicated region
    $region22: #{tpu_custom_call.1} parent=1 // pred_check
      _
    $region23: #{tpu_custom_call.1} parent=1 // pred_check_branch
      %56 = sbr.rel (0) target = $region25
    $region24: #{tpu_custom_call.1} parent=1 // pred_region
      %58 = vsyncadd [#allocation9], 0
      %s59 = sshll.u32 %s5, 4
      %s60 = int_to_ptr.hbm [resolvable:$true] %s59
      %s61 = sshll.u32 [#allocation8], 4
      %s62 = int_to_ptr.vmem [resolvable:$true] %s61
      %67 = dma.hbm_to_vmem [thread:$0]  %s60, 2048, %s62, [#allocation9], 128, 128, 8
    $region25: #{tpu_custom_call.1} parent=1 // pred_fallthru
      _
    // Predicated region
    $region26: #{tpu_custom_call.1} parent=1 // pred_check
      _
    $region27: #{tpu_custom_call.1} parent=1 // pred_check_branch
      %69 = sbr.rel (0) target = $region29
    $region28: #{tpu_custom_call.1} parent=1 // pred_region
      _
    $region29: #{tpu_custom_call.1} parent=1 // pred_fallthru
      _
    // Predicated region
    $region30: #{tpu_custom_call.1} parent=1 // pred_check
      _
    $region31: #{tpu_custom_call.1} parent=1 // pred_check_branch
      %71 = sbr.rel (0) target = $region33
    $region32: #{tpu_custom_call.1} parent=1 // pred_region
      %73 = dma.done [#allocation3], 128
    $region33: #{tpu_custom_call.1} parent=1 // pred_fallthru
      _
    // Predicated region
    $region34: #{tpu_custom_call.1} parent=1 // pred_check
      _
    $region35: #{tpu_custom_call.1} parent=1 // pred_check_branch
      %75 = sbr.rel (0) target = $region37
    $region36: #{tpu_custom_call.1} parent=1 // pred_region
      %77 = dma.done [#allocation6], 128
    $region37: #{tpu_custom_call.1} parent=1 // pred_fallthru
      _
    // Predicated region
    $region38: #{tpu_custom_call.1} parent=1 // pred_check
      _
    $region39: #{tpu_custom_call.1} parent=1 // pred_check_branch
      %79 = sbr.rel (0) target = $region41
    $region40: #{tpu_custom_call.1} parent=1 // pred_region
      %81 = dma.done [#allocation6], 2048
    $region41: #{tpu_custom_call.1} parent=1 // pred_fallthru
      _
    // Predicated region
    $region42: #{tpu_custom_call.1} parent=1 // pred_check
      _
    $region43: #{tpu_custom_call.1} parent=1 // pred_check_branch
      %83 = sbr.rel (0) target = $region45
    $region44: #{tpu_custom_call.1} parent=1 // pred_region
      %85 = dma.done [#allocation9], 2048
    $region45: #{tpu_custom_call.1} parent=1 // pred_fallthru
      _
    %v86 = vld [vmem:[#allocation2] sm:$0xff]
    %v87 = vld [vmem:[#allocation5] sm:$0xff]
    %v88 = vld [vmem:[%s2] sm:$0x1]
    %v90 = vperm.slane %v88, 0
    %vm92 = vcmask 64512
    %v94 = vsel %vm92, %v86, 0
    %96 = vmatpush.msra.mxu0 0.0
    %97 = vmatpush.msra.mxu0 0.0
    %98 = vmatpush.msra.mxu0 0.0
    %99 = vmatpush.msra.mxu0 0.0
    %100 = vmatpush.msra.mxu0 0.0
    %101 = vmatpush.msra.mxu0 0.0
    %102 = vmatpush.msra.mxu0 0.0
    %103 = vmatpush.msra.mxu0 0.0
    %104 = vmatpush.msra.mxu0 0.0
    %105 = vmatpush.msra.mxu0 0.0
    %106 = vmatpush.msra.mxu0 0.0
    %107 = vmatpush.msra.mxu0 0.0
    %108 = vmatpush.msra.mxu0 0.0
    %109 = vmatpush.msra.mxu0 0.0
    %110 = vmatpush.msra.mxu0 0.0
    %111 = vmatpush.msra.mxu0 %v87
    %112 = vmatmul.f32.gmra.mxu0 %v94
    %v113 = vpop.f32.mrf.mxu0
    %v114 = vadd.f32 %v90, %v113
    %115 = vdwg.mxu0
    %v116 = vmax.f32 %v114, 0.0
    %v117 = vld [vmem:[#allocation7] sm:$0xff]
    %v118 = vld [vmem:[#allocation7 + $0x8] sm:$0xff]
    %v119 = vld [vmem:[#allocation7 + $0x10] sm:$0xff]
    %v120 = vld [vmem:[#allocation7 + $0x18] sm:$0xff]
    %v121 = vld [vmem:[#allocation7 + $0x20] sm:$0xff]
    %v122 = vld [vmem:[#allocation7 + $0x28] sm:$0xff]
    %v123 = vld [vmem:[#allocation7 + $0x30] sm:$0xff]
    %v124 = vld [vmem:[#allocation7 + $0x38] sm:$0xff]
    %v125 = vld [vmem:[#allocation7 + $0x40] sm:$0xff]
    %v126 = vld [vmem:[#allocation7 + $0x48] sm:$0xff]
    %v127 = vld [vmem:[#allocation7 + $0x50] sm:$0xff]
    %v128 = vld [vmem:[#allocation7 + $0x58] sm:$0xff]
    %v129 = vld [vmem:[#allocation7 + $0x60] sm:$0xff]
    %v130 = vld [vmem:[#allocation7 + $0x68] sm:$0xff]
    %v131 = vld [vmem:[#allocation7 + $0x70] sm:$0xff]
    %v132 = vld [vmem:[#allocation7 + $0x78] sm:$0xff]
    %v133 = vld [vmem:[%s4] sm:$0x1]
    %v135 = vperm.slane %v133, 0
    %137 = vmatpush.msra.mxu0 %v132
    %138 = vmatpush.msra.mxu0 %v131
    %139 = vmatpush.msra.mxu0 %v130
    %140 = vmatpush.msra.mxu0 %v129
    %141 = vmatpush.msra.mxu0 %v128
    %142 = vmatpush.msra.mxu0 %v127
    %143 = vmatpush.msra.mxu0 %v126
    %144 = vmatpush.msra.mxu0 %v125
    %145 = vmatpush.msra.mxu0 %v124
    %146 = vmatpush.msra.mxu0 %v123
    %147 = vmatpush.msra.mxu0 %v122
    %148 = vmatpush.msra.mxu0 %v121
    %149 = vmatpush.msra.mxu0 %v120
    %150 = vmatpush.msra.mxu0 %v119
    %151 = vmatpush.msra.mxu0 %v118
    %152 = vmatpush.msra.mxu0 %v117
    %153 = vmatmul.f32.gmra.mxu0 %v116
    %v154 = vpop.f32.mrf.mxu0
    %v155 = vadd.f32 %v135, %v154
    %156 = vdwg.mxu0
    %v157 = vmax.f32 %v155, 0.0
    %v158 = vld [vmem:[#allocation8] sm:$0xff]
    %v159 = vld [vmem:[#allocation8 + $0x8] sm:$0xff]
    %v160 = vld [vmem:[#allocation8 + $0x10] sm:$0xff]
    %v161 = vld [vmem:[#allocation8 + $0x18] sm:$0xff]
    %v162 = vld [vmem:[#allocation8 + $0x20] sm:$0xff]
    %v163 = vld [vmem:[#allocation8 + $0x28] sm:$0xff]
    %v164 = vld [vmem:[#allocation8 + $0x30] sm:$0xff]
    %v165 = vld [vmem:[#allocation8 + $0x38] sm:$0xff]
    %v166 = vld [vmem:[#allocation8 + $0x40] sm:$0xff]
    %v167 = vld [vmem:[#allocation8 + $0x48] sm:$0xff]
    %v168 = vld [vmem:[#allocation8 + $0x50] sm:$0xff]
    %v169 = vld [vmem:[#allocation8 + $0x58] sm:$0xff]
    %v170 = vld [vmem:[#allocation8 + $0x60] sm:$0xff]
    %v171 = vld [vmem:[#allocation8 + $0x68] sm:$0xff]
    %v172 = vld [vmem:[#allocation8 + $0x70] sm:$0xff]
    %v173 = vld [vmem:[#allocation8 + $0x78] sm:$0xff]
    %v174 = vld [vmem:[%s6] sm:$0x1]
    %v176 = vperm.slane %v174, 0
    %178 = vmatpush.msra.mxu0 %v173
    %179 = vmatpush.msra.mxu0 %v172
    %180 = vmatpush.msra.mxu0 %v171
    %181 = vmatpush.msra.mxu0 %v170
    %182 = vmatpush.msra.mxu0 %v169
    %183 = vmatpush.msra.mxu0 %v168
    %184 = vmatpush.msra.mxu0 %v167
    %185 = vmatpush.msra.mxu0 %v166
    %186 = vmatpush.msra.mxu0 %v165
    %187 = vmatpush.msra.mxu0 %v164
    %188 = vmatpush.msra.mxu0 %v163
    %189 = vmatpush.msra.mxu0 %v162
    %190 = vmatpush.msra.mxu0 %v161
    %191 = vmatpush.msra.mxu0 %v160
    %192 = vmatpush.msra.mxu0 %v159
    %193 = vmatpush.msra.mxu0 %v158
    %194 = vmatmul.f32.gmra.mxu0 %v157
    %v195 = vpop.f32.mrf.mxu0
    %v196 = vadd.f32 %v176, %v195
    %197 = vdwg.mxu0
    %v198 = vtanh.pop %v196
    %199 = vst [vmem:[#allocation10] sm:$0xff] %v198
    // Predicated region
    $region46: #{tpu_custom_call.1} parent=1 // pred_check
      _
    $region47: #{tpu_custom_call.1} parent=1 // pred_check_branch
      %201 = sbr.rel (0) target = $region49
    $region48: #{tpu_custom_call.1} parent=1 // pred_region
      %203 = vsyncadd [#allocation4], 0
      %s205 = sshll.u32 [#allocation10], 4
      %s206 = int_to_ptr.vmem [resolvable:$true] %s205
      %s207 = sshll.u32 %s7, 4
      %s208 = int_to_ptr.hbm [resolvable:$true] %s207
      %210 = dma.vmem_to_hbm [thread:$0]  %s206, 128, %s208, [#allocation4]
    $region49: #{tpu_custom_call.1} parent=1 // pred_fallthru
      _
    // Predicated region
    $region50: #{tpu_custom_call.1} parent=1 // pred_check
      _
    $region51: #{tpu_custom_call.1} parent=1 // pred_check_branch
      %212 = sbr.rel (0) target = $region53
    $region52: #{tpu_custom_call.1} parent=1 // pred_region
      %214 = dma.done [#allocation4], 128
    $region53: #{tpu_custom_call.1} parent=1 // pred_fallthru
      _
    %215 = vsyncpa [#allocation3], 1
    %216 = vsyncpa [#allocation6], 1
    %217 = vsyncpa [#allocation9], 1
    %218 = vsyncpa [#allocation4], 1

</llo_original>
